<compile_context>
chip_gen: v7x
topology: tpu7x:2x2x1
jax: 0.10.0
libtpu: 0.0.40
codegen_flags: <defaults>
</compile_context>

<pallas_src>
import jax
import jax.numpy as jnp
from jax.experimental import pallas as pl
from jax.experimental.pallas import tpu as pltpu

LN_EPS = 1e-5  # nn.LayerNorm default


def _round_up(a, b):
    return -(-a // b) * b


def ffn_kernel(x_ref, gamma_ref, beta_ref, w1_ref, b1_ref, w2_ref, b2_ref,
               scale_ref, o_ref):
    # x_ref: (tile_m, D) block of flattened tokens.
    x = x_ref[...].astype(jnp.float32)

    # --- LayerNorm over the last dim (biased variance, like torch) in f32 on the VPU ---
    mean = jnp.mean(x, axis=-1, keepdims=True)
    var = jnp.mean((x - mean) ** 2, axis=-1, keepdims=True)
    xn = (x - mean) * jax.lax.rsqrt(var + LN_EPS)
    xn = xn * gamma_ref[...].astype(jnp.float32) + beta_ref[...].astype(jnp.float32)

    # --- fc1 on the MXU in the weights' native dtype, f32 accumulate ---
    h = jnp.dot(xn.astype(w1_ref.dtype), w1_ref[...],
                preferred_element_type=jnp.float32)
    h = h + b1_ref[...].astype(jnp.float32)

    # --- exact (erf) GELU, matching nn.GELU() default, in f32 ---
    h = 0.5 * h * (1.0 + jax.lax.erf(h * jnp.float32(0.7071067811865476)))

    # --- fc2 on the MXU, f32 accumulate ---
    y = jnp.dot(h.astype(w2_ref.dtype), w2_ref[...],
                preferred_element_type=jnp.float32)
    y = y + b2_ref[...].astype(jnp.float32)

    # --- learnable scalar scale (read from SMEM) ---
    o_ref[...] = (y * scale_ref[0]).astype(o_ref.dtype)


def feedforward_pallas(x, gamma, beta, w1, b1, w2, b2, scale, *, tile_m=256):
    """x: (B, S, D_in); w1: (D_in, H); w2: (H, D_out) (weights stored pre-transposed)."""
    B, S, D = x.shape
    H = w1.shape[1]
    Do = w2.shape[1]
    M = B * S

    # Token tile: big by default, capped for tiny inputs, always a multiple of 8.
    tile_m = _round_up(max(8, min(tile_m, _round_up(M, 8))), 8)
    M_pad = _round_up(M, tile_m)

    # Lane-dense feature dims: pad hidden and output to multiples of 128 with zeros.
    H_pad = _round_up(H, 128)
    Do_pad = _round_up(Do, 128)

    x2 = x.reshape(M, D)
    if M_pad != M:
        x2 = jnp.pad(x2, ((0, M_pad - M), (0, 0)))
    w1p = jnp.pad(w1, ((0, 0), (0, H_pad - H))) if H_pad != H else w1
    b1p = jnp.pad(b1, ((0, H_pad - H),)) if H_pad != H else b1
    w2p = jnp.pad(w2, ((0, H_pad - H), (0, Do_pad - Do))) if (H_pad != H or Do_pad != Do) else w2
    b2p = jnp.pad(b2, ((0, Do_pad - Do),)) if Do_pad != Do else b2

    grid_m = M_pad // tile_m

    out = pl.pallas_call(
        ffn_kernel,
        out_shape=jax.ShapeDtypeStruct((M_pad, Do_pad), x.dtype),
        grid_spec=pltpu.PrefetchScalarGridSpec(
            num_scalar_prefetch=0,
            grid=(grid_m,),
            in_specs=[
                pl.BlockSpec((tile_m, D), lambda i: (i, 0)),        # x tile
                pl.BlockSpec((1, D), lambda i: (0, 0)),             # LN gamma (resident)
                pl.BlockSpec((1, D), lambda i: (0, 0)),             # LN beta  (resident)
                pl.BlockSpec((D, H_pad), lambda i: (0, 0)),         # fc1 weight (in, hidden)
                pl.BlockSpec((1, H_pad), lambda i: (0, 0)),         # fc1 bias
                pl.BlockSpec((H_pad, Do_pad), lambda i: (0, 0)),    # fc2 weight (hidden, out)
                pl.BlockSpec((1, Do_pad), lambda i: (0, 0)),        # fc2 bias
                pl.BlockSpec(memory_space=pltpu.MemorySpace.SMEM),  # scale (scalar in SMEM)
            ],
            out_specs=pl.BlockSpec((tile_m, Do_pad), lambda i: (i, 0)),
        ),
        compiler_params=pltpu.CompilerParams(
            dimension_semantics=("parallel",),
            vmem_limit_bytes=48 * 1024 * 1024,
        ),
    )(x2, gamma.reshape(1, D), beta.reshape(1, D),
      w1p, b1p.reshape(1, H_pad), w2p, b2p.reshape(1, Do_pad),
      scale.reshape(1).astype(jnp.float32))

    return out[:M, :Do].reshape(B, S, Do)


def feedforward_ref(x, gamma, beta, w1, b1, w2, b2, scale):
    xf = x.astype(jnp.float32)
    mean = jnp.mean(xf, axis=-1, keepdims=True)
    var = jnp.mean((xf - mean) ** 2, axis=-1, keepdims=True)
    xn = (xf - mean) * jax.lax.rsqrt(var + LN_EPS) * gamma + beta
    h = xn @ w1 + b1
    h = 0.5 * h * (1.0 + jax.lax.erf(h / jnp.sqrt(2.0)))
    y = h @ w2 + b2
    return (y * scale[0]).astype(x.dtype)


if __name__ == "__main__":
    # Small shapes consistent with the module: (B, S, in_features)
    B, S = 2, 8
    in_features, hidden_features, out_features = 32, 64, 32

    key = jax.random.PRNGKey(0)
    kx, kw1, kb1, kw2, kb2, kg, kb = jax.random.split(key, 7)

    x = jax.random.normal(kx, (B, S, in_features), dtype=jnp.float32)

    # Deterministic synthetic parameters (shapes from FeedForward.__init__)
    gamma = 1.0 + 0.1 * jax.random.normal(kg, (in_features,), jnp.float32)   # LN weight
    beta = 0.1 * jax.random.normal(kb, (in_features,), jnp.float32)          # LN bias
    w1 = 0.1 * jax.random.normal(kw1, (in_features, hidden_features), jnp.float32)
    b1 = 0.1 * jax.random.normal(kb1, (hidden_features,), jnp.float32)
    w2 = 0.1 * jax.random.normal(kw2, (hidden_features, out_features), jnp.float32)
    b2 = 0.1 * jax.random.normal(kb2, (out_features,), jnp.float32)
    scale = jnp.ones((1,), jnp.float32)                                      # nn.Parameter(torch.ones(1))

    out = feedforward_pallas(x, gamma, beta, w1, b1, w2, b2, scale)
    out = jax.block_until_ready(out)

    ref = feedforward_ref(x, gamma, beta, w1, b1, w2, b2, scale)
    assert out.shape == (B, S, out_features)
    assert jnp.allclose(out, ref, atol=1e-4, rtol=1e-4), "mismatch vs JAX reference"

    print("KERNEL_OK")
</pallas_src>

<mosaic_0001>
module attributes {stable_mosaic.version = 11 : i64} {
  func.func @ffn_kernel(%arg0: i32, %arg1: memref<16x32xf32, #tpu.memory_space<vmem>>, %arg2: memref<1x32xf32, #tpu.memory_space<vmem>>, %arg3: memref<1x32xf32, #tpu.memory_space<vmem>>, %arg4: memref<32x128xf32, #tpu.memory_space<vmem>>, %arg5: memref<1x128xf32, #tpu.memory_space<vmem>>, %arg6: memref<128x128xf32, #tpu.memory_space<vmem>>, %arg7: memref<1x128xf32, #tpu.memory_space<vmem>>, %arg8: memref<1xf32, #tpu.memory_space<smem>>, %arg9: memref<16x128xf32, #tpu.memory_space<vmem>>) attributes {dimension_semantics = [#tpu.dimension_semantics<parallel>], iteration_bounds = array<i64: 1>, scalar_prefetch = 0 : i64, scratch_operands = 0 : i64, tpu.core_type = #tpu.core_type<tc>, window_params = [{transform_indices = @transform_0, window_bounds = array<i64: 16, 32>}, {pipeline_mode = #tpu.pipeline_mode<synchronous>, transform_indices = @transform_1, window_bounds = array<i64: 1, 32>}, {pipeline_mode = #tpu.pipeline_mode<synchronous>, transform_indices = @transform_2, window_bounds = array<i64: 1, 32>}, {pipeline_mode = #tpu.pipeline_mode<synchronous>, transform_indices = @transform_3, window_bounds = array<i64: 32, 128>}, {pipeline_mode = #tpu.pipeline_mode<synchronous>, transform_indices = @transform_4, window_bounds = array<i64: 1, 128>}, {pipeline_mode = #tpu.pipeline_mode<synchronous>, transform_indices = @transform_5, window_bounds = array<i64: 128, 128>}, {pipeline_mode = #tpu.pipeline_mode<synchronous>, transform_indices = @transform_6, window_bounds = array<i64: 1, 128>}, {transform_indices = @transform_7, window_bounds = array<i64: 1>}, {transform_indices = @transform_8, window_bounds = array<i64: 16, 128>}]} {
    %c0 = arith.constant 0 : index
    %c0_0 = arith.constant 0 : index
    %0 = vector.load %arg1[%c0, %c0_0] : memref<16x32xf32, #tpu.memory_space<vmem>>, vector<16x32xf32>
    %cst = arith.constant dense<0.000000e+00> : vector<16xf32>
    %1 = vector.multi_reduction <add>, %0, %cst [1] : vector<16x32xf32> to vector<16xf32>
    %2 = vector.shape_cast %1 : vector<16xf32> to vector<16x1xf32>
    %cst_1 = arith.constant 3.200000e+01 : f32
    %3 = vector.broadcast %cst_1 : f32 to vector<16x1xf32>
    %4 = arith.divf %2, %3 : vector<16x1xf32>
    %5 = vector.broadcast %4 : vector<16x1xf32> to vector<16x32xf32>
    %6 = arith.subf %0, %5 : vector<16x32xf32>
    %7 = arith.mulf %6, %6 : vector<16x32xf32>
    %cst_2 = arith.constant dense<0.000000e+00> : vector<16xf32>
    %8 = vector.multi_reduction <add>, %7, %cst_2 [1] : vector<16x32xf32> to vector<16xf32>
    %9 = vector.shape_cast %8 : vector<16xf32> to vector<16x1xf32>
    %cst_3 = arith.constant 3.200000e+01 : f32
    %10 = vector.broadcast %cst_3 : f32 to vector<16x1xf32>
    %11 = arith.divf %9, %10 : vector<16x1xf32>
    %12 = vector.broadcast %4 : vector<16x1xf32> to vector<16x32xf32>
    %13 = arith.subf %0, %12 : vector<16x32xf32>
    %cst_4 = arith.constant 9.99999974E-6 : f32
    %14 = vector.broadcast %cst_4 : f32 to vector<16x1xf32>
    %15 = arith.addf %11, %14 : vector<16x1xf32>
    %16 = math.rsqrt %15 : vector<16x1xf32>
    %17 = vector.broadcast %16 : vector<16x1xf32> to vector<16x32xf32>
    %18 = arith.mulf %13, %17 : vector<16x32xf32>
    %c0_5 = arith.constant 0 : index
    %c0_6 = arith.constant 0 : index
    %19 = vector.load %arg2[%c0_5, %c0_6] : memref<1x32xf32, #tpu.memory_space<vmem>>, vector<1x32xf32>
    %20 = vector.broadcast %19 : vector<1x32xf32> to vector<16x32xf32>
    %21 = arith.mulf %18, %20 : vector<16x32xf32>
    %c0_7 = arith.constant 0 : index
    %c0_8 = arith.constant 0 : index
    %22 = vector.load %arg3[%c0_7, %c0_8] : memref<1x32xf32, #tpu.memory_space<vmem>>, vector<1x32xf32>
    %23 = vector.broadcast %22 : vector<1x32xf32> to vector<16x32xf32>
    %24 = arith.addf %21, %23 : vector<16x32xf32>
    %c0_9 = arith.constant 0 : index
    %c0_10 = arith.constant 0 : index
    %25 = vector.load %arg4[%c0_9, %c0_10] : memref<32x128xf32, #tpu.memory_space<vmem>>, vector<32x128xf32>
    %cst_11 = arith.constant dense<0.000000e+00> : vector<16x128xf32>
    %26 = tpu.matmul %24, %25, %cst_11 {dimension_numbers = #tpu.dot_dimension_numbers<[1], [0], [0], [1], [0, 0, 1, 1], [], []>} : vector<16x32xf32>, vector<32x128xf32>, vector<16x128xf32> -> vector<16x128xf32>
    %c0_12 = arith.constant 0 : index
    %c0_13 = arith.constant 0 : index
    %27 = vector.load %arg5[%c0_12, %c0_13] : memref<1x128xf32, #tpu.memory_space<vmem>>, vector<1x128xf32>
    %28 = vector.broadcast %27 : vector<1x128xf32> to vector<16x128xf32>
    %29 = arith.addf %26, %28 : vector<16x128xf32>
    %cst_14 = arith.constant 5.000000e-01 : f32
    %30 = vector.broadcast %cst_14 : f32 to vector<16x128xf32>
    %31 = arith.mulf %30, %29 : vector<16x128xf32>
    %cst_15 = arith.constant 0.707106769 : f32
    %32 = vector.broadcast %cst_15 : f32 to vector<16x128xf32>
    %33 = arith.mulf %29, %32 : vector<16x128xf32>
    %34 = math.erf %33 : vector<16x128xf32>
    %cst_16 = arith.constant 1.000000e+00 : f32
    %35 = vector.broadcast %cst_16 : f32 to vector<16x128xf32>
    %36 = arith.addf %35, %34 : vector<16x128xf32>
    %37 = arith.mulf %31, %36 : vector<16x128xf32>
    %c0_17 = arith.constant 0 : index
    %c0_18 = arith.constant 0 : index
    %38 = vector.load %arg6[%c0_17, %c0_18] : memref<128x128xf32, #tpu.memory_space<vmem>>, vector<128x128xf32>
    %cst_19 = arith.constant dense<0.000000e+00> : vector<16x128xf32>
    %39 = tpu.matmul %37, %38, %cst_19 {dimension_numbers = #tpu.dot_dimension_numbers<[1], [0], [0], [1], [0, 0, 1, 1], [], []>} : vector<16x128xf32>, vector<128x128xf32>, vector<16x128xf32> -> vector<16x128xf32>
    %c0_20 = arith.constant 0 : index
    %c0_21 = arith.constant 0 : index
    %40 = vector.load %arg7[%c0_20, %c0_21] : memref<1x128xf32, #tpu.memory_space<vmem>>, vector<1x128xf32>
    %41 = vector.broadcast %40 : vector<1x128xf32> to vector<16x128xf32>
    %42 = arith.addf %39, %41 : vector<16x128xf32>
    %c0_22 = arith.constant 0 : index
    %43 = memref.load %arg8[%c0_22] : memref<1xf32, #tpu.memory_space<smem>>
    %44 = vector.broadcast %43 : f32 to vector<16x128xf32>
    %45 = arith.mulf %42, %44 : vector<16x128xf32>
    %c0_23 = arith.constant 0 : index
    %c0_24 = arith.constant 0 : index
    %46 = vector.load %arg9[%c0_23, %c0_24] : memref<16x128xf32, #tpu.memory_space<vmem>>, vector<16x128xf32>
    tpu.vector_store %arg9[%c0_23, %c0_24], %45 {strides = array<i32>} : memref<16x128xf32, #tpu.memory_space<vmem>>, vector<16x128xf32>,
    return
  }
  func.func @transform_0(%arg0: i32) -> (i32, i32) {
    %c0_i32 = arith.constant 0 : i32
    %c0_i32_0 = arith.constant 0 : i32
    return %arg0, %c0_i32 : i32, i32
  }
  func.func @transform_1(%arg0: i32) -> (i32, i32) {
    %c0_i32 = arith.constant 0 : i32
    %c0_i32_0 = arith.constant 0 : i32
    %c0_i32_1 = arith.constant 0 : i32
    return %c0_i32, %c0_i32_0 : i32, i32
  }
  func.func @transform_2(%arg0: i32) -> (i32, i32) {
    %c0_i32 = arith.constant 0 : i32
    %c0_i32_0 = arith.constant 0 : i32
    %c0_i32_1 = arith.constant 0 : i32
    return %c0_i32, %c0_i32_0 : i32, i32
  }
  func.func @transform_3(%arg0: i32) -> (i32, i32) {
    %c0_i32 = arith.constant 0 : i32
    %c0_i32_0 = arith.constant 0 : i32
    %c0_i32_1 = arith.constant 0 : i32
    return %c0_i32, %c0_i32_0 : i32, i32
  }
  func.func @transform_4(%arg0: i32) -> (i32, i32) {
    %c0_i32 = arith.constant 0 : i32
    %c0_i32_0 = arith.constant 0 : i32
    %c0_i32_1 = arith.constant 0 : i32
    return %c0_i32, %c0_i32_0 : i32, i32
  }
  func.func @transform_5(%arg0: i32) -> (i32, i32) {
    %c0_i32 = arith.constant 0 : i32
    %c0_i32_0 = arith.constant 0 : i32
    %c0_i32_1 = arith.constant 0 : i32
    return %c0_i32, %c0_i32_0 : i32, i32
  }
  func.func @transform_6(%arg0: i32) -> (i32, i32) {
    %c0_i32 = arith.constant 0 : i32
    %c0_i32_0 = arith.constant 0 : i32
    %c0_i32_1 = arith.constant 0 : i32
    return %c0_i32, %c0_i32_0 : i32, i32
  }
  func.func @transform_7(%arg0: i32) -> i32 {
    %c0_i32 = arith.constant 0 : i32
    %c0_i32_0 = arith.constant 0 : i32
    return %c0_i32 : i32
  }
  func.func @transform_8(%arg0: i32) -> (i32, i32) {
    %c0_i32 = arith.constant 0 : i32
    %c0_i32_0 = arith.constant 0 : i32
    return %arg0, %c0_i32 : i32, i32
  }
}

</mosaic_0001>

<llo_original>
// kernel: tpu_custom_call.1
$region0: #{tpu_custom_call.1}
  #allocation0 [shape = 'u32[]', space=smem, size = 0x4, offset = 0x4, fixed_abs, tag = 'smem constant byte address 0x4 - core index']
  #allocation1 [shape = 'u32[144,128]{1,0:T(1,128)}', space=vmem, size = 0x12000, scoped, tag = 'internal scratch']
  #allocation2 [shape = 'f32[1]{0:T(128)S(6)}', space=smem, size = 0x200, scoped, tag = 'scoped memory for tpu_custom_call.1']
  %s0 = inlined_call_operand.hbm [shape: f32[16,32], index: 0, kind: input, shape index: {}]
  %s1 = inlined_call_operand.vmem [shape: f32[1,32], index: 1, kind: input, shape index: {}]
  %s2 = inlined_call_operand.vmem [shape: f32[1,32], index: 2, kind: input, shape index: {}]
  %s3 = inlined_call_operand.hbm [shape: f32[32,128], index: 3, kind: input, shape index: {}]
  %s4 = inlined_call_operand.vmem [shape: f32[1,128], index: 4, kind: input, shape index: {}]
  %s5 = inlined_call_operand.hbm [shape: f32[128,128], index: 5, kind: input, shape index: {}]
  %s6 = inlined_call_operand.vmem [shape: f32[1,128], index: 6, kind: input, shape index: {}]
  %s7 = inlined_call_operand.<no memory space> [shape: f32[1], index: 7, kind: input, shape index: {}]
  %s8 = inlined_call_operand.hbm [shape: f32[16,128], index: 8, kind: output, shape index: {}]
  %s9 = sld [smem:[#allocation0]]
  $region54: #{tpu_custom_call.1} parent=0
    _
  %s11 = ssub.s32 1, %s9
  %s12 = scalar_select 0, %s11, %s9
  %13 = sst [smem:[#allocation2]] %s7
  $region1: #{tpu_custom_call.1} parent=0
    #allocation3 [shape = 'u8[8192]{0}', space=vmem, size = 0x2000, scoped, tag = 'input window, operand 0, single buffered']
    #allocation4 [shape = 's32[1]{0}', space=sflag, size = 0x4, scoped, tag = 'scoped memory for tpu_custom_call.1']
    #allocation5 [shape = 's32[1]{0}', space=sflag, size = 0x4, scoped, tag = 'scoped memory for tpu_custom_call.1']
    #allocation6 [shape = 'u8[16384]{0}', space=vmem, size = 0x4000, scoped, tag = 'input window, operand 3, single buffered']
    #allocation7 [shape = 's32[1]{0}', space=sflag, size = 0x4, scoped, tag = 'scoped memory for tpu_custom_call.1']
    #allocation8 [shape = 'u8[65536]{0}', space=vmem, size = 0x10000, scoped, tag = 'input window, operand 5, single buffered']
    #allocation9 [shape = 'u8[8192]{0}', space=vmem, size = 0x2000, scoped, tag = 'output window, operand 0, single buffered']
    %14 = vsyncpa [#allocation4], 0
    %15 = vsyncpa [#allocation7], 0
    %16 = vsyncpa [#allocation5], 0
    // Predicated region
    $region2: #{tpu_custom_call.1} parent=1 // pred_check
      _
    $region3: #{tpu_custom_call.1} parent=1 // pred_check_branch
      %18 = sbr.rel (0) target = $region5
    $region4: #{tpu_custom_call.1} parent=1 // pred_region
      %s20 = ssub.s32 256, 256
      %21 = vsyncadd [#allocation4], %s20
      %s22 = sshll.u32 [#allocation3], 4
      %s23 = int_to_ptr.vmem [resolvable:$true] %s22
      %28 = dma.hbm_to_vmem [thread:$0]  %s0, 256, %s23, [#allocation4], 128, 128, 8
    $region5: #{tpu_custom_call.1} parent=1 // pred_fallthru
      _
    // Predicated region
    $region6: #{tpu_custom_call.1} parent=1 // pred_check
      _
    $region7: #{tpu_custom_call.1} parent=1 // pred_check_branch
      %30 = sbr.rel (0) target = $region9
    $region8: #{tpu_custom_call.1} parent=1 // pred_region
      _
    $region9: #{tpu_custom_call.1} parent=1 // pred_fallthru
      _
    // Predicated region
    $region10: #{tpu_custom_call.1} parent=1 // pred_check
      _
    $region11: #{tpu_custom_call.1} parent=1 // pred_check_branch
      %32 = sbr.rel (0) target = $region13
    $region12: #{tpu_custom_call.1} parent=1 // pred_region
      _
    $region13: #{tpu_custom_call.1} parent=1 // pred_fallthru
      _
    // Predicated region
    $region14: #{tpu_custom_call.1} parent=1 // pred_check
      _
    $region15: #{tpu_custom_call.1} parent=1 // pred_check_branch
      %34 = sbr.rel (0) target = $region17
    $region16: #{tpu_custom_call.1} parent=1 // pred_region
      %s36 = ssub.s32 512, 512
      %37 = vsyncadd [#allocation7], %s36
      %s38 = sshll.u32 [#allocation6], 4
      %s39 = int_to_ptr.vmem [resolvable:$true] %s38
      %44 = dma.hbm_to_vmem [thread:$0]  %s3, 512, %s39, [#allocation7], 128, 128, 8
    $region17: #{tpu_custom_call.1} parent=1 // pred_fallthru
      _
    // Predicated region
    $region18: #{tpu_custom_call.1} parent=1 // pred_check
      _
    $region19: #{tpu_custom_call.1} parent=1 // pred_check_branch
      %46 = sbr.rel (0) target = $region21
    $region20: #{tpu_custom_call.1} parent=1 // pred_region
      _
    $region21: #{tpu_custom_call.1} parent=1 // pred_fallthru
      _
    // Predicated region
    $region22: #{tpu_custom_call.1} parent=1 // pred_check
      _
    $region23: #{tpu_custom_call.1} parent=1 // pred_check_branch
      %48 = sbr.rel (0) target = $region25
    $region24: #{tpu_custom_call.1} parent=1 // pred_region
      %s50 = ssub.s32 2048, 2048
      %51 = vsyncadd [#allocation7], %s50
      %s52 = sshll.u32 [#allocation8], 4
      %s53 = int_to_ptr.vmem [resolvable:$true] %s52
      %58 = dma.hbm_to_vmem [thread:$0]  %s5, 2048, %s53, [#allocation7], 128, 128, 8
    $region25: #{tpu_custom_call.1} parent=1 // pred_fallthru
      _
    // Predicated region
    $region26: #{tpu_custom_call.1} parent=1 // pred_check
      _
    $region27: #{tpu_custom_call.1} parent=1 // pred_check_branch
      %60 = sbr.rel (0) target = $region29
    $region28: #{tpu_custom_call.1} parent=1 // pred_region
      _
    $region29: #{tpu_custom_call.1} parent=1 // pred_fallthru
      _
    // Predicated region
    $region30: #{tpu_custom_call.1} parent=1 // pred_check
      _
    $region31: #{tpu_custom_call.1} parent=1 // pred_check_branch
      %62 = sbr.rel (0) target = $region33
    $region32: #{tpu_custom_call.1} parent=1 // pred_region
      _
    $region33: #{tpu_custom_call.1} parent=1 // pred_fallthru
      _
    // Predicated region
    $region34: #{tpu_custom_call.1} parent=1 // pred_check
      _
    $region35: #{tpu_custom_call.1} parent=1 // pred_check_branch
      %64 = sbr.rel (0) target = $region37
    $region36: #{tpu_custom_call.1} parent=1 // pred_region
      %65 = dma.done [#allocation4], 256
    $region37: #{tpu_custom_call.1} parent=1 // pred_fallthru
      _
    // Predicated region
    $region38: #{tpu_custom_call.1} parent=1 // pred_check
      _
    $region39: #{tpu_custom_call.1} parent=1 // pred_check_branch
      %67 = sbr.rel (0) target = $region41
    $region40: #{tpu_custom_call.1} parent=1 // pred_region
      %68 = dma.done [#allocation7], 512
    $region41: #{tpu_custom_call.1} parent=1 // pred_fallthru
      _
    // Predicated region
    $region42: #{tpu_custom_call.1} parent=1 // pred_check
      _
    $region43: #{tpu_custom_call.1} parent=1 // pred_check_branch
      %70 = sbr.rel (0) target = $region45
    $region44: #{tpu_custom_call.1} parent=1 // pred_region
      %71 = dma.done [#allocation7], 2048
    $region45: #{tpu_custom_call.1} parent=1 // pred_fallthru
      _
    %v72 = vld [vmem:[#allocation3] sm:$0xff]
    %v73 = vld [vmem:[#allocation3 + $0x8] sm:$0xff]
    %vm74 = vcmask 261120
    %v75 = vsel %vm74, %v72, 0.0
    %76 = vadd.xlane.f32.xlu0 %v75
    %v77 = vpop.xlane.xlu0 %76
    %v78 = vsel %vm74, %v73, 0.0
    %79 = vadd.xlane.f32.xlu0 %v78
    %v80 = vpop.xlane.xlu0 %79
    %v81 = vrcp.pop 32.0
    %v82 = vmul.f32 %v77, %v81
    %v83 = vmul.f32 %v80, %v81
    %v84 = vsub.f32 %v72, %v82
    %v85 = vsub.f32 %v73, %v83
    %v86 = vmul.f32 %v84, %v84
    %v87 = vmul.f32 %v85, %v85
    %v88 = vsel %vm74, %v86, 0.0
    %89 = vadd.xlane.f32.xlu0 %v88
    %v90 = vpop.xlane.xlu0 %89
    %v91 = vsel %vm74, %v87, 0.0
    %92 = vadd.xlane.f32.xlu0 %v91
    %v93 = vpop.xlane.xlu0 %92
    %v94 = vmul.f32 %v90, %v81
    %v95 = vmul.f32 %v93, %v81
    %v96 = vadd.f32 %v94, 1e-05
    %v97 = vadd.f32 %v95, 1e-05
    %v98 = vrsqrt.pop %v96
    %v99 = vrsqrt.pop %v97
    %v100 = vmul.f32 %v84, %v98
    %v101 = vmul.f32 %v85, %v99
    %v102 = vld [vmem:[%s1] sm:$0x1]
    %v104 = vlaneseq
    %v105 = vshrl.u32 %v104, 7
    %v106 = vsub.s32 0, %v105
    %v107 = vrot.slane %v102, %v106
    %v109 = vmul.f32 %v100, %v107
    %v110 = vmul.f32 %v101, %v107
    %v111 = vld [vmem:[%s2] sm:$0x1]
    %v113 = vlaneseq
    %v114 = vshrl.u32 %v113, 7
    %v115 = vsub.s32 0, %v114
    %v116 = vrot.slane %v111, %v115
    %v118 = vadd.f32 %v109, %v116
    %v119 = vadd.f32 %v110, %v116
    %v120 = vld [vmem:[#allocation6] sm:$0xff]
    %v121 = vld [vmem:[#allocation6 + $0x8] sm:$0xff]
    %v122 = vld [vmem:[#allocation6 + $0x10] sm:$0xff]
    %v123 = vld [vmem:[#allocation6 + $0x18] sm:$0xff]
    %v124 = vld [vmem:[%s4] sm:$0x1]
    %v126 = vlaneseq
    %v127 = vshrl.u32 %v126, 7
    %v128 = vsub.s32 0, %v127
    %v129 = vrot.slane %v124, %v128
    %v132 = vsel %vm74, %v118, 0
    %v135 = vsel %vm74, %v119, 0
    %137 = vmatprep.subr.mxu0 0.0
    %138 = vmatpush1.msra.mxu0 %v120
    %139 = vmatprep.subr.mxu0 0.0
    %140 = vmatpush1.msra.mxu0 %v121
    %141 = vmatprep.subr.mxu0 0.0
    %142 = vmatpush1.msra.mxu0 %v122
    %143 = vmatprep.subr.mxu0 0.0
    %144 = vmatpush1.msra.mxu0 %v123
    %145 = vmatprep.subr.mxu0 0.0
    %146 = vmatpush1.msra.mxu0 0.0
    %147 = vmatprep.subr.mxu0 0.0
    %148 = vmatpush1.msra.mxu0 0.0
    %149 = vmatprep.subr.mxu0 0.0
    %150 = vmatpush1.msra.mxu0 0.0
    %151 = vmatprep.subr.mxu0 0.0
    %152 = vmatpush1.msra.mxu0 0.0
    %153 = vmatprep.subr.mxu0 0.0
    %154 = vmatpush1.msra.mxu0 0.0
    %155 = vmatprep.subr.mxu0 0.0
    %156 = vmatpush1.msra.mxu0 0.0
    %157 = vmatprep.subr.mxu0 0.0
    %158 = vmatpush1.msra.mxu0 0.0
    %159 = vmatprep.subr.mxu0 0.0
    %160 = vmatpush1.msra.mxu0 0.0
    %161 = vmatprep.subr.mxu0 0.0
    %162 = vmatpush1.msra.mxu0 0.0
    %163 = vmatprep.subr.mxu0 0.0
    %164 = vmatpush1.msra.mxu0 0.0
    %165 = vmatprep.subr.mxu0 0.0
    %166 = vmatpush1.msra.mxu0 0.0
    %167 = vmatprep.subr.mxu0 0.0
    %168 = vmatpush1.msra.mxu0 0.0
    %169 = vmatprep.subr.mxu0 0.0
    %170 = vmatpush1.msra.mxu0 0.0
    %171 = vmatprep.subr.mxu0 0.0
    %172 = vmatpush1.msra.mxu0 0.0
    %173 = vmatprep.subr.mxu0 0.0
    %174 = vmatpush1.msra.mxu0 0.0
    %175 = vmatprep.subr.mxu0 0.0
    %176 = vmatpush1.msra.mxu0 0.0
    %177 = vmatprep.subr.mxu0 0.0
    %178 = vmatpush1.msra.mxu0 0.0
    %179 = vmatprep.subr.mxu0 0.0
    %180 = vmatpush1.msra.mxu0 0.0
    %181 = vmatprep.subr.mxu0 0.0
    %182 = vmatpush1.msra.mxu0 0.0
    %183 = vmatprep.subr.mxu0 0.0
    %184 = vmatpush1.msra.mxu0 0.0
    %185 = vmatprep.subr.mxu0 0.0
    %186 = vmatpush1.msra.mxu0 0.0
    %187 = vmatprep.subr.mxu0 0.0
    %188 = vmatpush1.msra.mxu0 0.0
    %189 = vmatprep.subr.mxu0 0.0
    %190 = vmatpush1.msra.mxu0 0.0
    %191 = vmatprep.subr.mxu0 0.0
    %192 = vmatpush1.msra.mxu0 0.0
    %193 = vmatprep.subr.mxu0 0.0
    %194 = vmatpush1.msra.mxu0 0.0
    %195 = vmatprep.subr.mxu0 0.0
    %196 = vmatpush1.msra.mxu0 0.0
    %197 = vmatprep.subr.mxu0 0.0
    %198 = vmatpush1.msra.mxu0 0.0
    %199 = vmatprep.subr.mxu0 0.0
    %200 = vmatpush1.msra.mxu0 0.0
    %201 = vmatprep.mubr.f32.mxu0 0.0
    %202 = vmatmul.mubr.f32.gmra.mrb[0].mxu0 %v132
    %v203 = vpop.f32.mrb[0].mxu0
    %v204 = vadd.f32 %v129, %v203
    %v205 = vpop.f32.mrb[0].mxu0
    %206 = vmatprep.mubr.f32.mxu0 0.0
    %207 = vmatmul.mubr.f32.gmra.mrb[0].mxu0 %v135
    %v208 = vpop.f32.mrb[0].mxu0
    %v209 = vadd.f32 %v129, %v208
    %v210 = vpop.f32.mrb[0].mxu0
    %211 = vdwg.mxu0
    %v212 = vmul.f32 %v204, 0.5
    %v213 = vmul.f32 %v209, 0.5
    %v214 = vmul.f32 %v204, 0.70710677
    %v215 = vmul.f32 %v209, 0.70710677
    %v216 = verf.f32.pop %v214
    %v217 = verf.f32.pop %v215
    %v218 = vadd.f32 %v216, 1.0
    %v219 = vadd.f32 %v217, 1.0
    %v220 = vmul.f32 %v212, %v218
    %v221 = vmul.f32 %v213, %v219
    %v222 = vld [vmem:[#allocation8] sm:$0xff]
    %v223 = vld [vmem:[#allocation8 + $0x8] sm:$0xff]
    %v224 = vld [vmem:[#allocation8 + $0x10] sm:$0xff]
    %v225 = vld [vmem:[#allocation8 + $0x18] sm:$0xff]
    %v226 = vld [vmem:[#allocation8 + $0x20] sm:$0xff]
    %v227 = vld [vmem:[#allocation8 + $0x28] sm:$0xff]
    %v228 = vld [vmem:[#allocation8 + $0x30] sm:$0xff]
    %v229 = vld [vmem:[#allocation8 + $0x38] sm:$0xff]
    %v230 = vld [vmem:[#allocation8 + $0x40] sm:$0xff]
    %v231 = vld [vmem:[#allocation8 + $0x48] sm:$0xff]
    %v232 = vld [vmem:[#allocation8 + $0x50] sm:$0xff]
    %v233 = vld [vmem:[#allocation8 + $0x58] sm:$0xff]
    %v234 = vld [vmem:[#allocation8 + $0x60] sm:$0xff]
    %v235 = vld [vmem:[#allocation8 + $0x68] sm:$0xff]
    %v236 = vld [vmem:[#allocation8 + $0x70] sm:$0xff]
    %v237 = vld [vmem:[#allocation8 + $0x78] sm:$0xff]
    %v238 = vld [vmem:[%s6] sm:$0x1]
    %v240 = vlaneseq
    %v241 = vshrl.u32 %v240, 7
    %v242 = vsub.s32 0, %v241
    %v243 = vrot.slane %v238, %v242
    %245 = vmatprep.subr.mxu0 0.0
    %246 = vmatpush1.msra.mxu0 %v222
    %247 = vmatprep.subr.mxu0 0.0
    %248 = vmatpush1.msra.mxu0 %v223
    %249 = vmatprep.subr.mxu0 0.0
    %250 = vmatpush1.msra.mxu0 %v224
    %251 = vmatprep.subr.mxu0 0.0
    %252 = vmatpush1.msra.mxu0 %v225
    %253 = vmatprep.subr.mxu0 0.0
    %254 = vmatpush1.msra.mxu0 %v226
    %255 = vmatprep.subr.mxu0 0.0
    %256 = vmatpush1.msra.mxu0 %v227
    %257 = vmatprep.subr.mxu0 0.0
    %258 = vmatpush1.msra.mxu0 %v228
    %259 = vmatprep.subr.mxu0 0.0
    %260 = vmatpush1.msra.mxu0 %v229
    %261 = vmatprep.subr.mxu0 0.0
    %262 = vmatpush1.msra.mxu0 %v230
    %263 = vmatprep.subr.mxu0 0.0
    %264 = vmatpush1.msra.mxu0 %v231
    %265 = vmatprep.subr.mxu0 0.0
    %266 = vmatpush1.msra.mxu0 %v232
    %267 = vmatprep.subr.mxu0 0.0
    %268 = vmatpush1.msra.mxu0 %v233
    %269 = vmatprep.subr.mxu0 0.0
    %270 = vmatpush1.msra.mxu0 %v234
    %271 = vmatprep.subr.mxu0 0.0
    %272 = vmatpush1.msra.mxu0 %v235
    %273 = vmatprep.subr.mxu0 0.0
    %274 = vmatpush1.msra.mxu0 %v236
    %275 = vmatprep.subr.mxu0 0.0
    %276 = vmatpush1.msra.mxu0 %v237
    %277 = vmatprep.subr.mxu0 0.0
    %278 = vmatpush1.msra.mxu0 0.0
    %279 = vmatprep.subr.mxu0 0.0
    %280 = vmatpush1.msra.mxu0 0.0
    %281 = vmatprep.subr.mxu0 0.0
    %282 = vmatpush1.msra.mxu0 0.0
    %283 = vmatprep.subr.mxu0 0.0
    %284 = vmatpush1.msra.mxu0 0.0
    %285 = vmatprep.subr.mxu0 0.0
    %286 = vmatpush1.msra.mxu0 0.0
    %287 = vmatprep.subr.mxu0 0.0
    %288 = vmatpush1.msra.mxu0 0.0
    %289 = vmatprep.subr.mxu0 0.0
    %290 = vmatpush1.msra.mxu0 0.0
    %291 = vmatprep.subr.mxu0 0.0
    %292 = vmatpush1.msra.mxu0 0.0
    %293 = vmatprep.subr.mxu0 0.0
    %294 = vmatpush1.msra.mxu0 0.0
    %295 = vmatprep.subr.mxu0 0.0
    %296 = vmatpush1.msra.mxu0 0.0
    %297 = vmatprep.subr.mxu0 0.0
    %298 = vmatpush1.msra.mxu0 0.0
    %299 = vmatprep.subr.mxu0 0.0
    %300 = vmatpush1.msra.mxu0 0.0
    %301 = vmatprep.subr.mxu0 0.0
    %302 = vmatpush1.msra.mxu0 0.0
    %303 = vmatprep.subr.mxu0 0.0
    %304 = vmatpush1.msra.mxu0 0.0
    %305 = vmatprep.subr.mxu0 0.0
    %306 = vmatpush1.msra.mxu0 0.0
    %307 = vmatprep.subr.mxu0 0.0
    %308 = vmatpush1.msra.mxu0 0.0
    %309 = vmatprep.mubr.f32.mxu0 0.0
    %310 = vmatmul.mubr.f32.gmra.mrb[0].mxu0 %v220
    %v311 = vpop.f32.mrb[0].mxu0
    %v312 = vadd.f32 %v243, %v311
    %v313 = vpop.f32.mrb[0].mxu0
    %314 = vmatprep.mubr.f32.mxu0 0.0
    %315 = vmatmul.mubr.f32.gmra.mrb[0].mxu0 %v221
    %v316 = vpop.f32.mrb[0].mxu0
    %v317 = vadd.f32 %v243, %v316
    %v318 = vpop.f32.mrb[0].mxu0
    %319 = vdwg.mxu0
    %s320 = sld [smem:[#allocation2]]
    %v321 = vstv %s320
    %v322 = vmul.f32 %v312, %v321
    %v323 = vmul.f32 %v317, %v321
    %324 = vst [vmem:[#allocation9] sm:$0xff] %v322
    %325 = vst [vmem:[#allocation9 + $0x8] sm:$0xff] %v323
    // Predicated region
    $region46: #{tpu_custom_call.1} parent=1 // pred_check
      _
    $region47: #{tpu_custom_call.1} parent=1 // pred_check_branch
      %327 = sbr.rel (0) target = $region49
    $region48: #{tpu_custom_call.1} parent=1 // pred_region
      %s329 = ssub.s32 256, 256
      %330 = vsyncadd [#allocation5], %s329
      %s331 = sshll.u32 [#allocation9], 4
      %s332 = int_to_ptr.vmem [resolvable:$true] %s331
      %337 = dma.vmem_to_hbm [thread:$0]  %s332, 256, %s8, [#allocation5], 128, 128, 8
    $region49: #{tpu_custom_call.1} parent=1 // pred_fallthru
      _
    // Predicated region
    $region50: #{tpu_custom_call.1} parent=1 // pred_check
      _
    $region51: #{tpu_custom_call.1} parent=1 // pred_check_branch
      %339 = sbr.rel (0) target = $region53
    $region52: #{tpu_custom_call.1} parent=1 // pred_region
      %340 = dma.done [#allocation5], 256
    $region53: #{tpu_custom_call.1} parent=1 // pred_fallthru
      _
    %341 = vsyncpa [#allocation4], 1
    %342 = vsyncpa [#allocation7], 1
    %343 = vsyncpa [#allocation5], 1

</llo_original>
